<compile_context>
chip_gen: v7x
topology: tpu7x:2x2x1
jax: 0.10.0
libtpu: 0.0.40
codegen_flags: <defaults>
</compile_context>

<pallas_src>
import functools

import jax
import jax.numpy as jnp
from jax import lax
from jax.experimental import pallas as pl
from jax.experimental.pallas import tpu as pltpu


# ---------------------------------------------------------------------------
# Pallas kernel: fused im2col + single matmul + bias (+ ReLU) per (n, oh-tile)
# ---------------------------------------------------------------------------
def _conv_kernel(x_ref, w_ref, b_ref, o_ref, *, ksize, stride, th, ow,
                 apply_relu):
    """
    x_ref: (HPp, WP, C)       bf16 -- whole padded image of this batch element
    w_ref: (KH*KW*C, OCp)     bf16 -- im2col weight matrix (kh, kw, c row order)
    b_ref: (1, OCp)           f32
    o_ref: (th, OW, OCp)      bf16 -- output tile, lane-dense over OCp
    """
    i = pl.program_id(1)                         # oh-tile index within image
    c = x_ref.shape[-1]
    ocp = o_ref.shape[-1]
    th_in = (th - 1) * stride + ksize            # haloed input-row extent

    oh0 = pl.multiple_of(i * (th * stride), th * stride)
    slab = x_ref[pl.ds(oh0, th_in), :, :]        # (th_in, WP, C) bf16

    # Build the (th*ow, KH*KW*C) im2col LHS in-register and do ONE MXU dot.
    taps = []
    for kh in range(ksize):
        for kw in range(ksize):
            taps.append(slab[kh:kh + (th - 1) * stride + 1:stride,
                             kw:kw + (ow - 1) * stride + 1:stride, :])
    lhs = jnp.concatenate(taps, axis=-1).reshape(th * ow, ksize * ksize * c)

    acc = jnp.dot(lhs, w_ref[...], preferred_element_type=jnp.float32)
    acc = acc + b_ref[...]
    if apply_relu:
        acc = jnp.maximum(acc, 0.0)
    o_ref[...] = acc.reshape(th, ow, ocp).astype(o_ref.dtype)


# ---------------------------------------------------------------------------
# Per-chip VMEM budget.
# ---------------------------------------------------------------------------
def _vmem_limit_bytes():
    try:
        cap = pltpu.get_tpu_info().vmem_capacity_bytes
    except Exception:
        cap = 64 * 1024 * 1024
    # ~32 MiB on 64-MiB parts (v7x), 64 MiB on 128-MiB parts (v5e/v6e).
    return int(min(max(cap // 2, 32 * 1024 * 1024), 64 * 1024 * 1024))


# ---------------------------------------------------------------------------
# NHWC bf16 path (use this end-to-end when chaining layers: no transposes).
# ---------------------------------------------------------------------------
def conv_layer_forward_nhwc(x_nhwc, weight, bias, *, kernel_size, stride,
                            is_last=False):
    """x_nhwc: (N,H,W,C); weight: (OC,C,KH,KW); bias: (OC,). Returns NHWC bf16."""
    n, h, w, c = x_nhwc.shape
    oc = weight.shape[0]
    pad = kernel_size // 2

    # Reflection pad (matches nn.ReflectionPad2d), cast operands to bf16.
    # TODO(synk): fold reflection padding into the kernel (reflected index
    # arithmetic on the unpadded input) to remove this extra HBM pass.
    xp = jnp.pad(x_nhwc, ((0, 0), (pad, pad), (pad, pad), (0, 0)),
                 mode="reflect").astype(jnp.bfloat16)
    hp, wp = xp.shape[1], xp.shape[2]
    oh = (hp - kernel_size) // stride + 1
    ow = (wp - kernel_size) // stride + 1

    ocp = ((oc + 127) // 128) * 128
    kk = kernel_size * kernel_size

    # (OC,C,KH,KW) -> (KH,KW,C,OC) -> (KH*KW*C, OCp); row order matches the
    # in-kernel tap-concatenation order (kh outer, kw, c inner).
    w_mat = jnp.transpose(weight, (2, 3, 1, 0)).reshape(kk * c, oc)
    w_mat = jnp.pad(w_mat, ((0, 0), (0, ocp - oc))).astype(jnp.bfloat16)
    b_pad = jnp.pad(bias.astype(jnp.float32), (0, ocp - oc)).reshape(1, ocp)

    # Output-row tile: target th*OW ~= 256 MXU rows, f32 accumulator <=128 KiB.
    acc_cap = max(1, (128 * 1024) // (ow * ocp * 4))
    th_target = max(1, 256 // max(ow, 1))
    th = max(1, min(oh, th_target, acc_cap))
    n_tiles = pl.cdiv(oh, th)
    ohp = n_tiles * th                           # padded OH (ragged tail OK)

    # Pad H so the last tile's haloed slab read stays in bounds.
    hp_need = (ohp - 1) * stride + kernel_size
    if hp_need > hp:
        xp = jnp.pad(xp, ((0, 0), (0, hp_need - hp), (0, 0), (0, 0)))
        hp = hp_need

    vmem_limit = _vmem_limit_bytes()
    img_bytes = hp * wp * c * 2                  # bf16 resident image
    img_spec_kwargs = {}
    if 2 * img_bytes > vmem_limit // 2:
        # Single-buffer the resident image: it is reused across all oh-tiles,
        # so losing the prefetch of the *next* image hides behind many steps.
        img_spec_kwargs["pipeline_mode"] = pl.Buffered(1)
    # TODO(synk): haloed row-slab manual-DMA path for images too large to be
    # VMEM-resident even single-buffered (mainly v7x's 64 MiB VMEM/TC).

    grid = (n, n_tiles)                          # batch axis leads -> preferred
                                                 # megacore split on v7x
    flops = 2 * n * oh * ow * c * kk * oc
    bytes_accessed = (xp.size * 2 + w_mat.size * 2 + b_pad.size * 4
                      + n * ohp * ow * ocp * 2)

    out_padded = pl.pallas_call(
        functools.partial(_conv_kernel, ksize=kernel_size, stride=stride,
                          th=th, ow=ow, apply_relu=not is_last),
        out_shape=jax.ShapeDtypeStruct((n, ohp, ow, ocp), jnp.bfloat16),
        grid_spec=pltpu.PrefetchScalarGridSpec(
            num_scalar_prefetch=0,
            grid=grid,
            in_specs=[
                # Whole padded image per batch element; block index depends
                # only on n, so it stays VMEM-resident across the oh-tiles
                # (DMA'd exactly once per image).
                pl.BlockSpec((None, hp, wp, c), lambda b, i: (b, 0, 0, 0),
                             **img_spec_kwargs),
                pl.BlockSpec((kk * c, ocp), lambda b, i: (0, 0)),
                pl.BlockSpec((1, ocp), lambda b, i: (0, 0)),
            ],
            out_specs=pl.BlockSpec((None, th, ow, ocp),
                                   lambda b, i: (b, i, 0, 0)),
        ),
        compiler_params=pltpu.CompilerParams(
            dimension_semantics=("parallel", "parallel"),
            vmem_limit_bytes=vmem_limit,
        ),
        cost_estimate=pl.CostEstimate(flops=flops, transcendentals=0,
                                      bytes_accessed=bytes_accessed),
    )(xp, w_mat, b_pad)

    # Drop OH grid padding and OC lane padding.
    return out_padded[:, :oh, :, :oc]


# ---------------------------------------------------------------------------
# PyTorch-interface wrapper: NCHW f32 in, NCHW f32 out (layout glue only).
# ---------------------------------------------------------------------------
def conv_layer_forward(x, weight, bias, *, kernel_size, stride, is_last=False):
    """x: (N, C, H, W) f32; weight: (OC, C, KH, KW); bias: (OC,). Returns NCHW."""
    x_nhwc = jnp.transpose(x, (0, 2, 3, 1))
    out = conv_layer_forward_nhwc(x_nhwc, weight, bias,
                                  kernel_size=kernel_size, stride=stride,
                                  is_last=is_last)
    return jnp.transpose(out, (0, 3, 1, 2)).astype(jnp.float32)


# ---------------------------------------------------------------------------
# Plain-JAX reference (same bf16 operand rounding, f32 accumulation).
# ---------------------------------------------------------------------------
def _reference(x, weight, bias, *, kernel_size, stride, is_last):
    pad = kernel_size // 2
    xp = jnp.pad(x, ((0, 0), (0, 0), (pad, pad), (pad, pad)), mode="reflect")
    xb = xp.astype(jnp.bfloat16).astype(jnp.float32)
    wb = weight.astype(jnp.bfloat16).astype(jnp.float32)
    out = lax.conv_general_dilated(
        xb, wb, window_strides=(stride, stride), padding="VALID",
        dimension_numbers=("NCHW", "OIHW", "NCHW"),
    ) + bias.reshape(1, -1, 1, 1)
    if not is_last:
        out = jnp.maximum(out, 0.0)
    return out


if __name__ == "__main__":
    N, C, H, W = 2, 4, 16, 16
    OC, KSZ, STRIDE = 8, 3, 1
    IS_LAST = False

    key = jax.random.PRNGKey(0)
    kx, kwt, kb = jax.random.split(key, 3)
    x = jax.random.normal(kx, (N, C, H, W), dtype=jnp.float32)

    # Conv2d-style uniform init.
    fan_in = C * KSZ * KSZ
    bound = 1.0 / (fan_in ** 0.5)
    weight = jax.random.uniform(kwt, (OC, C, KSZ, KSZ), jnp.float32, -bound, bound)
    bias = jax.random.uniform(kb, (OC,), jnp.float32, -bound, bound)

    fwd = jax.jit(functools.partial(conv_layer_forward, kernel_size=KSZ,
                                    stride=STRIDE, is_last=IS_LAST))
    out = jax.block_until_ready(fwd(x, weight, bias))

    ref = _reference(x, weight, bias, kernel_size=KSZ, stride=STRIDE,
                     is_last=IS_LAST)
    assert out.shape == (N, OC, H, W)
    # Kernel output is bf16-rounded (half the writeback bytes); compare with a
    # tolerance covering one bf16 ULP of the largest activation.
    assert jnp.allclose(out, ref, atol=2e-2, rtol=2e-2), float(
        jnp.max(jnp.abs(out - ref)))

    print("KERNEL_OK")
</pallas_src>

<mosaic_0001>
module attributes {stable_mosaic.version = 11 : i64} {
  func.func @_conv_kernel(%arg0: i32, %arg1: i32, %arg2: memref<1x18x18x4xbf16, #tpu.memory_space<vmem>>, %arg3: memref<36x128xbf16, #tpu.memory_space<vmem>>, %arg4: memref<1x128xf32, #tpu.memory_space<vmem>>, %arg5: memref<1x16x16x128xbf16, #tpu.memory_space<vmem>>) attributes {dimension_semantics = [#tpu.dimension_semantics<parallel>, #tpu.dimension_semantics<parallel>], iteration_bounds = array<i64: 2, 1>, scalar_prefetch = 0 : i64, scratch_operands = 0 : i64, tpu.core_type = #tpu.core_type<tc>, window_params = [{transform_indices = @transform_0, window_bounds = array<i64: 1, 18, 18, 4>}, {pipeline_mode = #tpu.pipeline_mode<synchronous>, transform_indices = @transform_1, window_bounds = array<i64: 36, 128>}, {pipeline_mode = #tpu.pipeline_mode<synchronous>, transform_indices = @transform_2, window_bounds = array<i64: 1, 128>}, {transform_indices = @transform_3, window_bounds = array<i64: 1, 16, 16, 128>}]} {
    %c16_i32 = arith.constant 16 : i32
    %0 = arith.muli %arg1, %c16_i32 : i32
    %1 = tpu.assume_multiple %0, 16 : i32
    %c0 = arith.constant 0 : index
    %2 = arith.index_cast %1 : i32 to index
    %c0_0 = arith.constant 0 : index
    %c0_1 = arith.constant 0 : index
    %3 = vector.load %arg2[%c0, %2, %c0_0, %c0_1] : memref<1x18x18x4xbf16, #tpu.memory_space<vmem>>, vector<1x18x18x4xbf16>
    %4 = vector.shape_cast %3 : vector<1x18x18x4xbf16> to vector<18x18x4xbf16>
    %5 = vector.extract_strided_slice %4 {offsets = [0, 0, 0], sizes = [16, 16, 4], strides = [1, 1, 1]} : vector<18x18x4xbf16> to vector<16x16x4xbf16>
    %6 = vector.extract_strided_slice %4 {offsets = [0, 1, 0], sizes = [16, 16, 4], strides = [1, 1, 1]} : vector<18x18x4xbf16> to vector<16x16x4xbf16>
    %7 = vector.extract_strided_slice %4 {offsets = [0, 2, 0], sizes = [16, 16, 4], strides = [1, 1, 1]} : vector<18x18x4xbf16> to vector<16x16x4xbf16>
    %8 = vector.extract_strided_slice %4 {offsets = [1, 0, 0], sizes = [16, 16, 4], strides = [1, 1, 1]} : vector<18x18x4xbf16> to vector<16x16x4xbf16>
    %9 = vector.extract_strided_slice %4 {offsets = [1, 1, 0], sizes = [16, 16, 4], strides = [1, 1, 1]} : vector<18x18x4xbf16> to vector<16x16x4xbf16>
    %10 = vector.extract_strided_slice %4 {offsets = [1, 2, 0], sizes = [16, 16, 4], strides = [1, 1, 1]} : vector<18x18x4xbf16> to vector<16x16x4xbf16>
    %11 = vector.extract_strided_slice %4 {offsets = [2, 0, 0], sizes = [16, 16, 4], strides = [1, 1, 1]} : vector<18x18x4xbf16> to vector<16x16x4xbf16>
    %12 = vector.extract_strided_slice %4 {offsets = [2, 1, 0], sizes = [16, 16, 4], strides = [1, 1, 1]} : vector<18x18x4xbf16> to vector<16x16x4xbf16>
    %13 = vector.extract_strided_slice %4 {offsets = [2, 2, 0], sizes = [16, 16, 4], strides = [1, 1, 1]} : vector<18x18x4xbf16> to vector<16x16x4xbf16>
    %14 = tpu.concatenate %5, %6, %7, %8, %9, %10, %11, %12, %13 in 2 : vector<16x16x4xbf16>, vector<16x16x4xbf16>, vector<16x16x4xbf16>, vector<16x16x4xbf16>, vector<16x16x4xbf16>, vector<16x16x4xbf16>, vector<16x16x4xbf16>, vector<16x16x4xbf16>, vector<16x16x4xbf16> -> vector<16x16x36xbf16>
    %15 = vector.shape_cast %14 : vector<16x16x36xbf16> to vector<256x36xbf16>
    %c0_2 = arith.constant 0 : index
    %c0_3 = arith.constant 0 : index
    %16 = vector.load %arg3[%c0_2, %c0_3] : memref<36x128xbf16, #tpu.memory_space<vmem>>, vector<36x128xbf16>
    %cst = arith.constant dense<0.000000e+00> : vector<256x128xf32>
    %17 = tpu.matmul %15, %16, %cst {dimension_numbers = #tpu.dot_dimension_numbers<[1], [0], [0], [1], [0, 0, 1, 1], [], []>} : vector<256x36xbf16>, vector<36x128xbf16>, vector<256x128xf32> -> vector<256x128xf32>
    %c0_4 = arith.constant 0 : index
    %c0_5 = arith.constant 0 : index
    %18 = vector.load %arg4[%c0_4, %c0_5] : memref<1x128xf32, #tpu.memory_space<vmem>>, vector<1x128xf32>
    %19 = vector.broadcast %18 : vector<1x128xf32> to vector<256x128xf32>
    %20 = arith.addf %17, %19 : vector<256x128xf32>
    %cst_6 = arith.constant 0.000000e+00 : f32
    %21 = vector.broadcast %cst_6 : f32 to vector<256x128xf32>
    %22 = arith.maximumf %20, %21 : vector<256x128xf32>
    %23 = vector.shape_cast %22 : vector<256x128xf32> to vector<16x16x128xf32>
    %24 = arith.truncf %23 : vector<16x16x128xf32> to vector<16x16x128xbf16>
    %c0_7 = arith.constant 0 : index
    %c0_8 = arith.constant 0 : index
    %c0_9 = arith.constant 0 : index
    %c0_10 = arith.constant 0 : index
    %25 = vector.load %arg5[%c0_7, %c0_8, %c0_9, %c0_10] : memref<1x16x16x128xbf16, #tpu.memory_space<vmem>>, vector<1x16x16x128xbf16>
    %26 = vector.shape_cast %25 : vector<1x16x16x128xbf16> to vector<16x16x128xbf16>
    %27 = vector.shape_cast %24 : vector<16x16x128xbf16> to vector<1x16x16x128xbf16>
    tpu.vector_store %arg5[%c0_7, %c0_8, %c0_9, %c0_10], %27 {strides = array<i32>} : memref<1x16x16x128xbf16, #tpu.memory_space<vmem>>, vector<1x16x16x128xbf16>,
    return
  }
  func.func @transform_0(%arg0: i32, %arg1: i32) -> (i32, i32, i32, i32) {
    %c0_i32 = arith.constant 0 : i32
    %c0_i32_0 = arith.constant 0 : i32
    %c0_i32_1 = arith.constant 0 : i32
    %c0_i32_2 = arith.constant 0 : i32
    return %arg0, %c0_i32, %c0_i32_0, %c0_i32_1 : i32, i32, i32, i32
  }
  func.func @transform_1(%arg0: i32, %arg1: i32) -> (i32, i32) {
    %c0_i32 = arith.constant 0 : i32
    %c0_i32_0 = arith.constant 0 : i32
    %c0_i32_1 = arith.constant 0 : i32
    return %c0_i32, %c0_i32_0 : i32, i32
  }
  func.func @transform_2(%arg0: i32, %arg1: i32) -> (i32, i32) {
    %c0_i32 = arith.constant 0 : i32
    %c0_i32_0 = arith.constant 0 : i32
    %c0_i32_1 = arith.constant 0 : i32
    return %c0_i32, %c0_i32_0 : i32, i32
  }
  func.func @transform_3(%arg0: i32, %arg1: i32) -> (i32, i32, i32, i32) {
    %c0_i32 = arith.constant 0 : i32
    %c0_i32_0 = arith.constant 0 : i32
    %c0_i32_1 = arith.constant 0 : i32
    return %arg0, %arg1, %c0_i32, %c0_i32_0 : i32, i32, i32, i32
  }
}

</mosaic_0001>

<llo_original>
// kernel: conv_layer_forward.1
$region0: #{conv_layer_forward.1}
  #allocation0 [shape = 'u32[]', space=smem, size = 0x4, offset = 0x4, fixed_abs, tag = 'smem constant byte address 0x4 - core index']
  #allocation1 [shape = 'u32[144,128]{1,0:T(1,128)}', space=vmem, size = 0x12000, scoped, tag = 'internal scratch']
  %s0 = inlined_call_operand.vmem [shape: bf16[2,18,18,4], index: 0, kind: input, shape index: {}]
  %s1 = inlined_call_operand.vmem [shape: bf16[36,128], index: 1, kind: input, shape index: {}]
  %s2 = inlined_call_operand.vmem [shape: f32[1,128], index: 2, kind: input, shape index: {}]
  %s3 = inlined_call_operand.vmem [shape: bf16[2,16,16,128], index: 3, kind: output, shape index: {}]
  %s4 = sld [smem:[#allocation0]]
  $region45: #{conv_layer_forward.1} parent=0
    _
  %s6 = ssub.s32 1, %s4
  %s7 = scalar_select 0, %s6, %s4
  loop: start=0, step=1, limit=4
  $region2: #{conv_layer_forward.1} parent=0 // loop_pre_header
    _
  $region3: #{conv_layer_forward.1} parent=0 // loop_header
    %s9 = sphi 0, %s13
    %p10 = scmp.ge.s32.totalorder %s9, 4
    %s16 = sphi 0, %s28
    %s17 = sphi 0, %s24
    %s18 = sphi 0, %s16
    %s19 = sphi 0, %s17
    %s20 = sphi 0, %s18
    %s21 = sphi 0, %s19
    %s31 = sphi 0, %s33
    %s34 = sphi 0, %s31
    %s35 = sphi 0, %s34
    %s51 = sphi 0, %s35
    %s55 = sphi 0, %s55
    %s57 = sphi 0, %s55
    %s58 = sphi 0, %s57
    %s72 = sphi 0, %s58
    %s76 = sphi 0, %s76
    %s78 = sphi 0, %s76
    %s79 = sphi 0, %s78
    %s93 = sphi 0, %s79
    %s101 = sphi 0, %s103
    %s104 = sphi 0, %s101
    %s105 = sphi 0, %s104
    %s121 = sphi 0, %s105
  $region4: #{conv_layer_forward.1} parent=0 // loop_header_branch
    %12 = sbr.rel (%p10) target = $region8
  $region5: #{conv_layer_forward.1} parent=0 // loop_body
    %s14 = ssub.s32 %s9, 1
    %s15 = ssub.s32 %s9, 2
    %s22 = sadd.s32 1, %s17
    %p23 = scmp.ge.s32.totalorder %s22, 1
    %s24 = scalar_select %p23, 0, %s22
    %s25 = sadd.s32 1, %s16
    %s26 = scalar_select %p23, %s25, %s16
    %p27 = scmp.ge.s32.totalorder %s26, 2
    %s28 = scalar_select %p27, 0, %s26
    %s29 = ssub.s32 %s16, %s28
    %p30 = scmp.eq.s32.totalorder %s29, 0
    %s32 = sadd.s32 %s31, 1
    %s33 = scalar_select %p30, %s31, %s32
    %p36 = pneg %p30
    %p37 = scmp.eq.s32.totalorder %s9, 1
    %p38 = por %p36, %p37
    %p39 = scmp.ne.s32.totalorder %s31, %s34
    %p40 = scmp.eq.s32.totalorder %s9, 0
    %p41 = por %p39, %p40
    %p42 = scmp.ne.s32.totalorder %s31, %s34
    %p43 = scmp.eq.s32.totalorder %s14, 1
    %p44 = por %p42, %p43
    %p45 = scmp.ne.s32.totalorder %s34, %s35
    %p46 = scmp.eq.s32.totalorder %s14, 0
    %p47 = por %p45, %p46
    %p48 = scmp.ne.s32.totalorder %s34, %s35
    %p49 = scmp.eq.s32.totalorder %s15, 1
    %p50 = por %p48, %p49
    %p52 = scmp.ne.s32.totalorder %s35, %s51
    %p53 = scmp.eq.s32.totalorder %s15, 0
    %p54 = por %p52, %p53
    %s56 = sadd.s32 %s55, 1
    %p59 = scmp.eq.s32.totalorder %s9, 1
    %p60 = scmp.ne.s32.totalorder %s55, %s57
    %p61 = scmp.eq.s32.totalorder %s9, 0
    %p62 = por %p60, %p61
    %p63 = scmp.ne.s32.totalorder %s55, %s57
    %p64 = scmp.eq.s32.totalorder %s14, 1
    %p65 = por %p63, %p64
    %p66 = scmp.ne.s32.totalorder %s57, %s58
    %p67 = scmp.eq.s32.totalorder %s14, 0
    %p68 = por %p66, %p67
    %p69 = scmp.ne.s32.totalorder %s57, %s58
    %p70 = scmp.eq.s32.totalorder %s15, 1
    %p71 = por %p69, %p70
    %p73 = scmp.ne.s32.totalorder %s58, %s72
    %p74 = scmp.eq.s32.totalorder %s15, 0
    %p75 = por %p73, %p74
    %s77 = sadd.s32 %s76, 1
    %p80 = scmp.eq.s32.totalorder %s9, 1
    %p81 = scmp.ne.s32.totalorder %s76, %s78
    %p82 = scmp.eq.s32.totalorder %s9, 0
    %p83 = por %p81, %p82
    %p84 = scmp.ne.s32.totalorder %s76, %s78
    %p85 = scmp.eq.s32.totalorder %s14, 1
    %p86 = por %p84, %p85
    %p87 = scmp.ne.s32.totalorder %s78, %s79
    %p88 = scmp.eq.s32.totalorder %s14, 0
    %p89 = por %p87, %p88
    %p90 = scmp.ne.s32.totalorder %s78, %s79
    %p91 = scmp.eq.s32.totalorder %s15, 1
    %p92 = por %p90, %p91
    %p94 = scmp.ne.s32.totalorder %s79, %s93
    %p95 = scmp.eq.s32.totalorder %s15, 0
    %p96 = por %p94, %p95
    %s97 = ssub.s32 %s16, %s28
    %s98 = ssub.s32 %s17, %s24
    %s99 = sor.u32 %s97, %s98
    %p100 = scmp.eq.s32.totalorder %s99, 0
    %s102 = sadd.s32 %s101, 1
    %s103 = scalar_select %p100, %s101, %s102
    %p106 = pneg %p100
    %p107 = scmp.eq.s32.totalorder %s9, 1
    %p108 = por %p106, %p107
    %p109 = scmp.ne.s32.totalorder %s101, %s104
    %p110 = scmp.eq.s32.totalorder %s9, 0
    %p111 = por %p109, %p110
    %p112 = scmp.ne.s32.totalorder %s101, %s104
    %p113 = scmp.eq.s32.totalorder %s14, 1
    %p114 = por %p112, %p113
    %p115 = scmp.ne.s32.totalorder %s104, %s105
    %p116 = scmp.eq.s32.totalorder %s14, 0
    %p117 = por %p115, %p116
    %p118 = scmp.ne.s32.totalorder %s104, %s105
    %p119 = scmp.eq.s32.totalorder %s15, 1
    %p120 = por %p118, %p119
    %p122 = scmp.ne.s32.totalorder %s105, %s121
    %p123 = scmp.eq.s32.totalorder %s15, 0
    %p124 = por %p122, %p123
    %p125 = scmp.le.s32.totalorder 1, %s9
    %p126 = scmp.lt.s32.totalorder %s9, 3
    %p127 = pnand %p125, %p126
    %p128 = pneg %p127
    // Predicated region
    $region9: #{conv_layer_forward.1} parent=5 // pred_check
      _
    $region10: #{conv_layer_forward.1} parent=5 // pred_check_branch
      %130 = sbr.rel (%p127) target = $region12
    $region11: #{conv_layer_forward.1} parent=5 // pred_region
      %s131 = ssub.s32 %s9, 1
      // Predicated region
      $region13: #{conv_layer_forward.1} parent=11 // pred_check
        %p132 = pneg %p68
      $region14: #{conv_layer_forward.1} parent=11 // pred_check_branch
        %134 = sbr.rel (%p132) target = $region16
      $region15: #{conv_layer_forward.1} parent=11 // pred_region
        _
      $region16: #{conv_layer_forward.1} parent=11 // pred_fallthru
        _
      // Predicated region
      $region17: #{conv_layer_forward.1} parent=11 // pred_check
        %p135 = pneg %p89
      $region18: #{conv_layer_forward.1} parent=11 // pred_check_branch
        %137 = sbr.rel (%p135) target = $region20
      $region19: #{conv_layer_forward.1} parent=11 // pred_region
        _
      $region20: #{conv_layer_forward.1} parent=11 // pred_fallthru
        _
    $region12: #{conv_layer_forward.1} parent=5 // pred_fallthru
      _
    %p138 = scmp.lt.s32.totalorder %s9, 2
    // Predicated region
    $region21: #{conv_layer_forward.1} parent=5 // pred_check
      %p139 = pneg %p138
    $region22: #{conv_layer_forward.1} parent=5 // pred_check_branch
      %141 = sbr.rel (%p139) target = $region24
    $region23: #{conv_layer_forward.1} parent=5 // pred_region
      // Predicated region
      $region25: #{conv_layer_forward.1} parent=23 // pred_check
        %p142 = pneg %p41
      $region26: #{conv_layer_forward.1} parent=23 // pred_check_branch
        %144 = sbr.rel (%p142) target = $region28
      $region27: #{conv_layer_forward.1} parent=23 // pred_region
        %p145 = scmp.lt.s32.totalorder %s16, 1
        %s146 = scalar_select %p145, %s16, 1
        %s147 = smul.addr %s146, 54
        %s148 = smul.addr %s147, 4
        %s149 = scalar_lea.vmem %s0, %s148
      $region28: #{conv_layer_forward.1} parent=23 // pred_fallthru
        _
    $region24: #{conv_layer_forward.1} parent=5 // pred_fallthru
      _
    %p150 = scmp.le.s32.totalorder 1, %s9
    %p151 = scmp.lt.s32.totalorder %s9, 3
    %p152 = pnand %p150, %p151
    %p153 = pneg %p152
    // Predicated region
    $region29: #{conv_layer_forward.1} parent=5 // pred_check
      _
    $region30: #{conv_layer_forward.1} parent=5 // pred_check_branch
      %155 = sbr.rel (%p152) target = $region32
    $region31: #{conv_layer_forward.1} parent=5 // pred_region
      %s156 = ssub.s32 %s9, 1
      %p157 = scmp.lt.s32.totalorder %s18, 1
      %s158 = scalar_select %p157, %s18, 1
      %s159 = smul.addr %s158, 54
      %s160 = smul.addr %s159, 4
      %s161 = scalar_lea.vmem %s0, %s160
      %p162 = pneg %p47
      %p163 = pneg %p44
      %p164 = pneg %p68
      %p165 = pneg %p65
      %p166 = pneg %p89
      %p167 = pneg %p86
      %p168 = pneg %p117
      %p169 = pneg %p114
      %s170 = smul.u32 16, %s19
      %p171 = scmp.lt.s32.totalorder %s18, 1
      %s172 = scalar_select %p171, %s18, 1
      %p173 = scmp.lt.s32.totalorder %s170, 15
      %s174 = scalar_select %p173, %s170, 15
      %s175 = smul.addr %s174, 2
      %s176 = smul.addr %s172, 32
      %s177 = sadd.s32 %s175, %s176
      %s178 = smul.addr %s177, 4
      %s179 = scalar_lea.vmem %s3, %s178
      %p180 = scmp.lt.s32.totalorder %s18, 1
      %s181 = scalar_select %p180, %s18, 1
      %s182 = smul.addr %s181, 54
      %s183 = smul.addr %s182, 4
      %s184 = scalar_lea.vmem %s0, %s183
      %s185 = smul.u32 16, %s19
      %p186 = scmp.lt.s32.totalorder %s18, 1
      %s187 = scalar_select %p186, %s18, 1
      %p188 = scmp.lt.s32.totalorder %s185, 15
      %s189 = scalar_select %p188, %s185, 15
      %s190 = smul.addr %s189, 2
      %s191 = smul.addr %s187, 32
      %s192 = sadd.s32 %s190, %s191
      %s193 = smul.addr %s192, 4
      %s194 = scalar_lea.vmem %s3, %s193
      %s195 = smul.u32 16, %s19
      %s197 = smul.u32 %s19, 16
      %s198 = smul.u32 %s197, 3
      %s199 = smul.addr %s198, 4
      %s200 = scalar_lea.vmem %s184, %s199
      %v201 = vld [vmem:[%s200] sm:$0xf]
      %v202 = vld [vmem:[%s200 + $0x4] sm:$0xf]
      %v203 = vld [vmem:[%s200 + $0x8] sm:$0x1]
      %v204 = vld [vmem:[%s200 + $0xc] sm:$0xf]
      %v205 = vld [vmem:[%s200 + $0x10] sm:$0xf]
      %v206 = vld [vmem:[%s200 + $0x14] sm:$0x1]
      %v207 = vld [vmem:[%s200 + $0x18] sm:$0xf]
      %v208 = vld [vmem:[%s200 + $0x1c] sm:$0xf]
      %v209 = vld [vmem:[%s200 + $0x20] sm:$0x1]
      %v210 = vld [vmem:[%s200 + $0x24] sm:$0xf]
      %v211 = vld [vmem:[%s200 + $0x28] sm:$0xf]
      %v212 = vld [vmem:[%s200 + $0x2c] sm:$0x1]
      %v213 = vld [vmem:[%s200 + $0x30] sm:$0xf]
      %v214 = vld [vmem:[%s200 + $0x34] sm:$0xf]
      %v215 = vld [vmem:[%s200 + $0x38] sm:$0x1]
      %v216 = vld [vmem:[%s200 + $0x3c] sm:$0xf]
      %v217 = vld [vmem:[%s200 + $0x40] sm:$0xf]
      %v218 = vld [vmem:[%s200 + $0x44] sm:$0x1]
      %v219 = vld [vmem:[%s200 + $0x48] sm:$0xf]
      %v220 = vld [vmem:[%s200 + $0x4c] sm:$0xf]
      %v221 = vld [vmem:[%s200 + $0x50] sm:$0x1]
      %v222 = vld [vmem:[%s200 + $0x54] sm:$0xf]
      %v223 = vld [vmem:[%s200 + $0x58] sm:$0xf]
      %v224 = vld [vmem:[%s200 + $0x5c] sm:$0x1]
      %v225 = vld [vmem:[%s200 + $0x60] sm:$0xf]
      %v226 = vld [vmem:[%s200 + $0x64] sm:$0xf]
      %v227 = vld [vmem:[%s200 + $0x68] sm:$0x1]
      %v228 = vld [vmem:[%s200 + $0x6c] sm:$0xf]
      %v229 = vld [vmem:[%s200 + $0x70] sm:$0xf]
      %v230 = vld [vmem:[%s200 + $0x74] sm:$0x1]
      %v231 = vld [vmem:[%s200 + $0x78] sm:$0xf]
      %v232 = vld [vmem:[%s200 + $0x7c] sm:$0xf]
      %v233 = vld [vmem:[%s200 + $0x80] sm:$0x1]
      %v234 = vld [vmem:[%s200 + $0x84] sm:$0xf]
      %v235 = vld [vmem:[%s200 + $0x88] sm:$0xf]
      %v236 = vld [vmem:[%s200 + $0x8c] sm:$0x1]
      %v237 = vld [vmem:[%s200 + $0x90] sm:$0xf]
      %v238 = vld [vmem:[%s200 + $0x94] sm:$0xf]
      %v239 = vld [vmem:[%s200 + $0x98] sm:$0x1]
      %v240 = vld [vmem:[%s200 + $0x9c] sm:$0xf]
      %v241 = vld [vmem:[%s200 + $0xa0] sm:$0xf]
      %v242 = vld [vmem:[%s200 + $0xa4] sm:$0x1]
      %v243 = vld [vmem:[%s200 + $0xa8] sm:$0xf]
      %v244 = vld [vmem:[%s200 + $0xac] sm:$0xf]
      %v245 = vld [vmem:[%s200 + $0xb0] sm:$0x1]
      %v246 = vld [vmem:[%s200 + $0xb4] sm:$0xf]
      %v247 = vld [vmem:[%s200 + $0xb8] sm:$0xf]
      %v248 = vld [vmem:[%s200 + $0xbc] sm:$0x1]
      %v249 = vld [vmem:[%s200 + $0xc0] sm:$0xf]
      %v250 = vld [vmem:[%s200 + $0xc4] sm:$0xf]
      %v251 = vld [vmem:[%s200 + $0xc8] sm:$0x1]
      %v252 = vld [vmem:[%s200 + $0xcc] sm:$0xf]
      %v253 = vld [vmem:[%s200 + $0xd0] sm:$0xf]
      %v254 = vld [vmem:[%s200 + $0xd4] sm:$0x1]
      %v287 = vunpack.c.l.b16 %v201
      %v288 = vunpack.c.l.b16 %v202
      %v289 = vunpack.c.l.b16 %v204
      %v290 = vunpack.c.l.b16 %v205
      %v291 = vunpack.c.l.b16 %v207
      %v292 = vunpack.c.l.b16 %v208
      %v293 = vunpack.c.l.b16 %v210
      %v294 = vunpack.c.l.b16 %v211
      %v295 = vunpack.c.l.b16 %v213
      %v296 = vunpack.c.l.b16 %v214
      %v297 = vunpack.c.l.b16 %v216
      %v298 = vunpack.c.l.b16 %v217
      %v299 = vunpack.c.l.b16 %v219
      %v300 = vunpack.c.l.b16 %v220
      %v301 = vunpack.c.l.b16 %v222
      %v302 = vunpack.c.l.b16 %v223
      %v303 = vunpack.c.l.b16 %v225
      %v304 = vunpack.c.l.b16 %v226
      %v305 = vunpack.c.l.b16 %v228
      %v306 = vunpack.c.l.b16 %v229
      %v307 = vunpack.c.l.b16 %v231
      %v308 = vunpack.c.l.b16 %v232
      %v309 = vunpack.c.l.b16 %v234
      %v310 = vunpack.c.l.b16 %v235
      %v311 = vunpack.c.l.b16 %v237
      %v312 = vunpack.c.l.b16 %v238
      %v313 = vunpack.c.l.b16 %v240
      %v314 = vunpack.c.l.b16 %v241
      %v315 = vunpack.c.l.b16 %v243
      %v316 = vunpack.c.l.b16 %v244
      %v317 = vunpack.c.l.b16 %v246
      %v318 = vunpack.c.l.b16 %v247
      %v319 = vpack.c.b16 %v288, %v287
      %v320 = vpack.c.b16 %v290, %v289
      %v321 = vpack.c.b16 %v292, %v291
      %v322 = vpack.c.b16 %v294, %v293
      %v323 = vpack.c.b16 %v296, %v295
      %v324 = vpack.c.b16 %v298, %v297
      %v325 = vpack.c.b16 %v300, %v299
      %v326 = vpack.c.b16 %v302, %v301
      %v327 = vpack.c.b16 %v304, %v303
      %v328 = vpack.c.b16 %v306, %v305
      %v329 = vpack.c.b16 %v308, %v307
      %v330 = vpack.c.b16 %v310, %v309
      %v331 = vpack.c.b16 %v312, %v311
      %v332 = vpack.c.b16 %v314, %v313
      %v333 = vpack.c.b16 %v316, %v315
      %v334 = vpack.c.b16 %v318, %v317
      %v351 = vunpack.c.l.b16 %v203
      %v352 = vunpack.c.l.b16 %v206
      %v353 = vunpack.c.l.b16 %v209
      %v354 = vunpack.c.l.b16 %v212
      %v355 = vunpack.c.l.b16 %v215
      %v356 = vunpack.c.l.b16 %v218
      %v357 = vunpack.c.l.b16 %v221
      %v358 = vunpack.c.l.b16 %v224
      %v359 = vunpack.c.l.b16 %v227
      %v360 = vunpack.c.l.b16 %v230
      %v361 = vunpack.c.l.b16 %v233
      %v362 = vunpack.c.l.b16 %v236
      %v363 = vunpack.c.l.b16 %v239
      %v364 = vunpack.c.l.b16 %v242
      %v365 = vunpack.c.l.b16 %v245
      %v366 = vunpack.c.l.b16 %v248
      %v367 = vpack.c.b16 %v351, %v351
      %v368 = vpack.c.b16 %v352, %v352
      %v369 = vpack.c.b16 %v353, %v353
      %v370 = vpack.c.b16 %v354, %v354
      %v371 = vpack.c.b16 %v355, %v355
      %v372 = vpack.c.b16 %v356, %v356
      %v373 = vpack.c.b16 %v357, %v357
      %v374 = vpack.c.b16 %v358, %v358
      %v375 = vpack.c.b16 %v359, %v359
      %v376 = vpack.c.b16 %v360, %v360
      %v377 = vpack.c.b16 %v361, %v361
      %v378 = vpack.c.b16 %v362, %v362
      %v379 = vpack.c.b16 %v363, %v363
      %v380 = vpack.c.b16 %v364, %v364
      %v381 = vpack.c.b16 %v365, %v365
      %v382 = vpack.c.b16 %v366, %v366
      %vm383 = vsmask.f32 7424
      %v385 = vshrl.u32 %v319, 16
      %v387 = vshll.u32 %v319, 16
      %v389 = vrot.slane %v387, 1
      %v390 = vor.u32 %v385, %v389
      %v392 = vshll.u32 %v367, 16
      %v394 = vrot.slane %v392, 1
      %v395 = vsel %vm383, %v390, %v394
      %v397 = vshrl.u32 %v320, 16
      %v399 = vshll.u32 %v320, 16
      %v401 = vrot.slane %v399, 1
      %v402 = vor.u32 %v397, %v401
      %v404 = vshll.u32 %v368, 16
      %v406 = vrot.slane %v404, 1
      %v407 = vsel %vm383, %v402, %v406
      %v409 = vshrl.u32 %v321, 16
      %v411 = vshll.u32 %v321, 16
      %v413 = vrot.slane %v411, 1
      %v414 = vor.u32 %v409, %v413
      %v416 = vshll.u32 %v369, 16
      %v418 = vrot.slane %v416, 1
      %v419 = vsel %vm383, %v414, %v418
      %v421 = vshrl.u32 %v322, 16
      %v423 = vshll.u32 %v322, 16
      %v425 = vrot.slane %v423, 1
      %v426 = vor.u32 %v421, %v425
      %v428 = vshll.u32 %v370, 16
      %v430 = vrot.slane %v428, 1
      %v431 = vsel %vm383, %v426, %v430
      %v433 = vshrl.u32 %v323, 16
      %v435 = vshll.u32 %v323, 16
      %v437 = vrot.slane %v435, 1
      %v438 = vor.u32 %v433, %v437
      %v440 = vshll.u32 %v371, 16
      %v442 = vrot.slane %v440, 1
      %v443 = vsel %vm383, %v438, %v442
      %v445 = vshrl.u32 %v324, 16
      %v447 = vshll.u32 %v324, 16
      %v449 = vrot.slane %v447, 1
      %v450 = vor.u32 %v445, %v449
      %v452 = vshll.u32 %v372, 16
      %v454 = vrot.slane %v452, 1
      %v455 = vsel %vm383, %v450, %v454
      %v457 = vshrl.u32 %v325, 16
      %v459 = vshll.u32 %v325, 16
      %v461 = vrot.slane %v459, 1
      %v462 = vor.u32 %v457, %v461
      %v464 = vshll.u32 %v373, 16
      %v466 = vrot.slane %v464, 1
      %v467 = vsel %vm383, %v462, %v466
      %v469 = vshrl.u32 %v326, 16
      %v471 = vshll.u32 %v326, 16
      %v473 = vrot.slane %v471, 1
      %v474 = vor.u32 %v469, %v473
      %v476 = vshll.u32 %v374, 16
      %v478 = vrot.slane %v476, 1
      %v479 = vsel %vm383, %v474, %v478
      %v481 = vshrl.u32 %v327, 16
      %v483 = vshll.u32 %v327, 16
      %v485 = vrot.slane %v483, 1
      %v486 = vor.u32 %v481, %v485
      %v488 = vshll.u32 %v375, 16
      %v490 = vrot.slane %v488, 1
      %v491 = vsel %vm383, %v486, %v490
      %v493 = vshrl.u32 %v328, 16
      %v495 = vshll.u32 %v328, 16
      %v497 = vrot.slane %v495, 1
      %v498 = vor.u32 %v493, %v497
      %v500 = vshll.u32 %v376, 16
      %v502 = vrot.slane %v500, 1
      %v503 = vsel %vm383, %v498, %v502
      %v505 = vshrl.u32 %v329, 16
      %v507 = vshll.u32 %v329, 16
      %v509 = vrot.slane %v507, 1
      %v510 = vor.u32 %v505, %v509
      %v512 = vshll.u32 %v377, 16
      %v514 = vrot.slane %v512, 1
      %v515 = vsel %vm383, %v510, %v514
      %v517 = vshrl.u32 %v330, 16
      %v519 = vshll.u32 %v330, 16
      %v521 = vrot.slane %v519, 1
      %v522 = vor.u32 %v517, %v521
      %v524 = vshll.u32 %v378, 16
      %v526 = vrot.slane %v524, 1
      %v527 = vsel %vm383, %v522, %v526
      %v529 = vshrl.u32 %v331, 16
      %v531 = vshll.u32 %v331, 16
      %v533 = vrot.slane %v531, 1
      %v534 = vor.u32 %v529, %v533
      %v536 = vshll.u32 %v379, 16
      %v538 = vrot.slane %v536, 1
      %v539 = vsel %vm383, %v534, %v538
      %v541 = vshrl.u32 %v332, 16
      %v543 = vshll.u32 %v332, 16
      %v545 = vrot.slane %v543, 1
      %v546 = vor.u32 %v541, %v545
      %v548 = vshll.u32 %v380, 16
      %v550 = vrot.slane %v548, 1
      %v551 = vsel %vm383, %v546, %v550
      %v553 = vshrl.u32 %v333, 16
      %v555 = vshll.u32 %v333, 16
      %v557 = vrot.slane %v555, 1
      %v558 = vor.u32 %v553, %v557
      %v560 = vshll.u32 %v381, 16
      %v562 = vrot.slane %v560, 1
      %v563 = vsel %vm383, %v558, %v562
      %v565 = vshrl.u32 %v334, 16
      %v567 = vshll.u32 %v334, 16
      %v569 = vrot.slane %v567, 1
      %v570 = vor.u32 %v565, %v569
      %v572 = vshll.u32 %v382, 16
      %v574 = vrot.slane %v572, 1
      %v575 = vsel %vm383, %v570, %v574
      %576 = vrot.lane.b32.xlu0 %v395, 4
      %v577 = vpop.permute.xlu0 %576
      %578 = vrot.lane.b32.xlu0 %v407, 4
      %v579 = vpop.permute.xlu0 %578
      %580 = vrot.lane.b32.xlu0 %v419, 4
      %v581 = vpop.permute.xlu0 %580
      %582 = vrot.lane.b32.xlu0 %v431, 4
      %v583 = vpop.permute.xlu0 %582
      %584 = vrot.lane.b32.xlu0 %v443, 4
      %v585 = vpop.permute.xlu0 %584
      %586 = vrot.lane.b32.xlu0 %v455, 4
      %v587 = vpop.permute.xlu0 %586
      %588 = vrot.lane.b32.xlu0 %v467, 4
      %v589 = vpop.permute.xlu0 %588
      %590 = vrot.lane.b32.xlu0 %v479, 4
      %v591 = vpop.permute.xlu0 %590
      %592 = vrot.lane.b32.xlu0 %v491, 4
      %v593 = vpop.permute.xlu0 %592
      %594 = vrot.lane.b32.xlu0 %v503, 4
      %v595 = vpop.permute.xlu0 %594
      %596 = vrot.lane.b32.xlu0 %v515, 4
      %v597 = vpop.permute.xlu0 %596
      %598 = vrot.lane.b32.xlu0 %v527, 4
      %v599 = vpop.permute.xlu0 %598
      %600 = vrot.lane.b32.xlu0 %v539, 4
      %v601 = vpop.permute.xlu0 %600
      %602 = vrot.lane.b32.xlu0 %v551, 4
      %v603 = vpop.permute.xlu0 %602
      %604 = vrot.lane.b32.xlu0 %v563, 4
      %v605 = vpop.permute.xlu0 %604
      %606 = vrot.lane.b32.xlu0 %v575, 4
      %v607 = vpop.permute.xlu0 %606
      %vm608 = vcmask 1046528
      %v609 = vrot.slane %v319, 1
      %v610 = vrot.slane %v367, 1
      %v611 = vsel %vm608, %v609, %v610
      %v612 = vrot.slane %v320, 1
      %v613 = vrot.slane %v368, 1
      %v614 = vsel %vm608, %v612, %v613
      %v615 = vrot.slane %v321, 1
      %v616 = vrot.slane %v369, 1
      %v617 = vsel %vm608, %v615, %v616
      %v618 = vrot.slane %v322, 1
      %v619 = vrot.slane %v370, 1
      %v620 = vsel %vm608, %v618, %v619
      %v621 = vrot.slane %v323, 1
      %v622 = vrot.slane %v371, 1
      %v623 = vsel %vm608, %v621, %v622
      %v624 = vrot.slane %v324, 1
      %v625 = vrot.slane %v372, 1
      %v626 = vsel %vm608, %v624, %v625
      %v627 = vrot.slane %v325, 1
      %v628 = vrot.slane %v373, 1
      %v629 = vsel %vm608, %v627, %v628
      %v630 = vrot.slane %v326, 1
      %v631 = vrot.slane %v374, 1
      %v632 = vsel %vm608, %v630, %v631
      %v633 = vrot.slane %v327, 1
      %v634 = vrot.slane %v375, 1
      %v635 = vsel %vm608, %v633, %v634
      %v636 = vrot.slane %v328, 1
      %v637 = vrot.slane %v376, 1
      %v638 = vsel %vm608, %v636, %v637
      %v639 = vrot.slane %v329, 1
      %v640 = vrot.slane %v377, 1
      %v641 = vsel %vm608, %v639, %v640
      %v642 = vrot.slane %v330, 1
      %v643 = vrot.slane %v378, 1
      %v644 = vsel %vm608, %v642, %v643
      %v645 = vrot.slane %v331, 1
      %v646 = vrot.slane %v379, 1
      %v647 = vsel %vm608, %v645, %v646
      %v648 = vrot.slane %v332, 1
      %v649 = vrot.slane %v380, 1
      %v650 = vsel %vm608, %v648, %v649
      %v651 = vrot.slane %v333, 1
      %v652 = vrot.slane %v381, 1
      %v653 = vsel %vm608, %v651, %v652
      %v654 = vrot.slane %v334, 1
      %v655 = vrot.slane %v382, 1
      %v656 = vsel %vm608, %v654, %v655
      %657 = vrot.lane.b32.xlu0 %v611, 8
      %v658 = vpop.permute.xlu0 %657
      %659 = vrot.lane.b32.xlu0 %v614, 8
      %v660 = vpop.permute.xlu0 %659
      %661 = vrot.lane.b32.xlu0 %v617, 8
      %v662 = vpop.permute.xlu0 %661
      %663 = vrot.lane.b32.xlu0 %v620, 8
      %v664 = vpop.permute.xlu0 %663
      %665 = vrot.lane.b32.xlu0 %v623, 8
      %v666 = vpop.permute.xlu0 %665
      %667 = vrot.lane.b32.xlu0 %v626, 8
      %v668 = vpop.permute.xlu0 %667
      %669 = vrot.lane.b32.xlu0 %v629, 8
      %v670 = vpop.permute.xlu0 %669
      %671 = vrot.lane.b32.xlu0 %v632, 8
      %v672 = vpop.permute.xlu0 %671
      %673 = vrot.lane.b32.xlu0 %v635, 8
      %v674 = vpop.permute.xlu0 %673
      %675 = vrot.lane.b32.xlu0 %v638, 8
      %v676 = vpop.permute.xlu0 %675
      %677 = vrot.lane.b32.xlu0 %v641, 8
      %v678 = vpop.permute.xlu0 %677
      %679 = vrot.lane.b32.xlu0 %v644, 8
      %v680 = vpop.permute.xlu0 %679
      %681 = vrot.lane.b32.xlu0 %v647, 8
      %v682 = vpop.permute.xlu0 %681
      %683 = vrot.lane.b32.xlu0 %v650, 8
      %v684 = vpop.permute.xlu0 %683
      %685 = vrot.lane.b32.xlu0 %v653, 8
      %v686 = vpop.permute.xlu0 %685
      %687 = vrot.lane.b32.xlu0 %v656, 8
      %v688 = vpop.permute.xlu0 %687
      %v691 = vunpack.c.l.b16 %v249
      %v692 = vunpack.c.l.b16 %v250
      %v693 = vpack.c.b16 %v692, %v691
      %694 = vrot.lane.b32.xlu0 %v320, 12
      %v695 = vpop.permute.xlu0 %694
      %696 = vrot.lane.b32.xlu0 %v321, 12
      %v697 = vpop.permute.xlu0 %696
      %698 = vrot.lane.b32.xlu0 %v322, 12
      %v699 = vpop.permute.xlu0 %698
      %700 = vrot.lane.b32.xlu0 %v323, 12
      %v701 = vpop.permute.xlu0 %700
      %702 = vrot.lane.b32.xlu0 %v324, 12
      %v703 = vpop.permute.xlu0 %702
      %704 = vrot.lane.b32.xlu0 %v325, 12
      %v705 = vpop.permute.xlu0 %704
      %706 = vrot.lane.b32.xlu0 %v326, 12
      %v707 = vpop.permute.xlu0 %706
      %708 = vrot.lane.b32.xlu0 %v327, 12
      %v709 = vpop.permute.xlu0 %708
      %710 = vrot.lane.b32.xlu0 %v328, 12
      %v711 = vpop.permute.xlu0 %710
      %712 = vrot.lane.b32.xlu0 %v329, 12
      %v713 = vpop.permute.xlu0 %712
      %714 = vrot.lane.b32.xlu0 %v330, 12
      %v715 = vpop.permute.xlu0 %714
      %716 = vrot.lane.b32.xlu0 %v331, 12
      %v717 = vpop.permute.xlu0 %716
      %718 = vrot.lane.b32.xlu0 %v332, 12
      %v719 = vpop.permute.xlu0 %718
      %720 = vrot.lane.b32.xlu0 %v333, 12
      %v721 = vpop.permute.xlu0 %720
      %722 = vrot.lane.b32.xlu0 %v334, 12
      %v723 = vpop.permute.xlu0 %722
      %724 = vrot.lane.b32.xlu0 %v693, 12
      %v725 = vpop.permute.xlu0 %724
      %v727 = vunpack.c.l.b16 %v251
      %v728 = vpack.c.b16 %v727, %v727
      %v730 = vshrl.u32 %v693, 16
      %v732 = vshll.u32 %v693, 16
      %v734 = vrot.slane %v732, 1
      %v735 = vor.u32 %v730, %v734
      %v737 = vshll.u32 %v728, 16
      %v739 = vrot.slane %v737, 1
      %v740 = vsel %vm383, %v735, %v739
      %741 = vrot.lane.b32.xlu0 %v407, 16
      %v742 = vpop.permute.xlu0 %741
      %743 = vrot.lane.b32.xlu0 %v419, 16
      %v744 = vpop.permute.xlu0 %743
      %745 = vrot.lane.b32.xlu0 %v431, 16
      %v746 = vpop.permute.xlu0 %745
      %747 = vrot.lane.b32.xlu0 %v443, 16
      %v748 = vpop.permute.xlu0 %747
      %749 = vrot.lane.b32.xlu0 %v455, 16
      %v750 = vpop.permute.xlu0 %749
      %751 = vrot.lane.b32.xlu0 %v467, 16
      %v752 = vpop.permute.xlu0 %751
      %753 = vrot.lane.b32.xlu0 %v479, 16
      %v754 = vpop.permute.xlu0 %753
      %755 = vrot.lane.b32.xlu0 %v491, 16
      %v756 = vpop.permute.xlu0 %755
      %757 = vrot.lane.b32.xlu0 %v503, 16
      %v758 = vpop.permute.xlu0 %757
      %759 = vrot.lane.b32.xlu0 %v515, 16
      %v760 = vpop.permute.xlu0 %759
      %761 = vrot.lane.b32.xlu0 %v527, 16
      %v762 = vpop.permute.xlu0 %761
      %763 = vrot.lane.b32.xlu0 %v539, 16
      %v764 = vpop.permute.xlu0 %763
      %765 = vrot.lane.b32.xlu0 %v551, 16
      %v766 = vpop.permute.xlu0 %765
      %767 = vrot.lane.b32.xlu0 %v563, 16
      %v768 = vpop.permute.xlu0 %767
      %769 = vrot.lane.b32.xlu0 %v575, 16
      %v770 = vpop.permute.xlu0 %769
      %771 = vrot.lane.b32.xlu0 %v740, 16
      %v772 = vpop.permute.xlu0 %771
      %v773 = vrot.slane %v693, 1
      %v774 = vrot.slane %v728, 1
      %v775 = vsel %vm608, %v773, %v774
      %776 = vrot.lane.b32.xlu0 %v614, 20
      %v777 = vpop.permute.xlu0 %776
      %778 = vrot.lane.b32.xlu0 %v617, 20
      %v779 = vpop.permute.xlu0 %778
      %780 = vrot.lane.b32.xlu0 %v620, 20
      %v781 = vpop.permute.xlu0 %780
      %782 = vrot.lane.b32.xlu0 %v623, 20
      %v783 = vpop.permute.xlu0 %782
      %784 = vrot.lane.b32.xlu0 %v626, 20
      %v785 = vpop.permute.xlu0 %784
      %786 = vrot.lane.b32.xlu0 %v629, 20
      %v787 = vpop.permute.xlu0 %786
      %788 = vrot.lane.b32.xlu0 %v632, 20
      %v789 = vpop.permute.xlu0 %788
      %790 = vrot.lane.b32.xlu0 %v635, 20
      %v791 = vpop.permute.xlu0 %790
      %792 = vrot.lane.b32.xlu0 %v638, 20
      %v793 = vpop.permute.xlu0 %792
      %794 = vrot.lane.b32.xlu0 %v641, 20
      %v795 = vpop.permute.xlu0 %794
      %796 = vrot.lane.b32.xlu0 %v644, 20
      %v797 = vpop.permute.xlu0 %796
      %798 = vrot.lane.b32.xlu0 %v647, 20
      %v799 = vpop.permute.xlu0 %798
      %800 = vrot.lane.b32.xlu0 %v650, 20
      %v801 = vpop.permute.xlu0 %800
      %802 = vrot.lane.b32.xlu0 %v653, 20
      %v803 = vpop.permute.xlu0 %802
      %804 = vrot.lane.b32.xlu0 %v656, 20
      %v805 = vpop.permute.xlu0 %804
      %806 = vrot.lane.b32.xlu0 %v775, 20
      %v807 = vpop.permute.xlu0 %806
      %v810 = vunpack.c.l.b16 %v252
      %v811 = vunpack.c.l.b16 %v253
      %v812 = vpack.c.b16 %v811, %v810
      %813 = vrot.lane.b32.xlu0 %v321, 24
      %v814 = vpop.permute.xlu0 %813
      %815 = vrot.lane.b32.xlu0 %v322, 24
      %v816 = vpop.permute.xlu0 %815
      %817 = vrot.lane.b32.xlu0 %v323, 24
      %v818 = vpop.permute.xlu0 %817
      %819 = vrot.lane.b32.xlu0 %v324, 24
      %v820 = vpop.permute.xlu0 %819
      %821 = vrot.lane.b32.xlu0 %v325, 24
      %v822 = vpop.permute.xlu0 %821
      %823 = vrot.lane.b32.xlu0 %v326, 24
      %v824 = vpop.permute.xlu0 %823
      %825 = vrot.lane.b32.xlu0 %v327, 24
      %v826 = vpop.permute.xlu0 %825
      %827 = vrot.lane.b32.xlu0 %v328, 24
      %v828 = vpop.permute.xlu0 %827
      %829 = vrot.lane.b32.xlu0 %v329, 24
      %v830 = vpop.permute.xlu0 %829
      %831 = vrot.lane.b32.xlu0 %v330, 24
      %v832 = vpop.permute.xlu0 %831
      %833 = vrot.lane.b32.xlu0 %v331, 24
      %v834 = vpop.permute.xlu0 %833
      %835 = vrot.lane.b32.xlu0 %v332, 24
      %v836 = vpop.permute.xlu0 %835
      %837 = vrot.lane.b32.xlu0 %v333, 24
      %v838 = vpop.permute.xlu0 %837
      %839 = vrot.lane.b32.xlu0 %v334, 24
      %v840 = vpop.permute.xlu0 %839
      %841 = vrot.lane.b32.xlu0 %v693, 24
      %v842 = vpop.permute.xlu0 %841
      %843 = vrot.lane.b32.xlu0 %v812, 24
      %v844 = vpop.permute.xlu0 %843
      %v846 = vunpack.c.l.b16 %v254
      %v847 = vpack.c.b16 %v846, %v846
      %v849 = vshrl.u32 %v812, 16
      %v851 = vshll.u32 %v812, 16
      %v853 = vrot.slane %v851, 1
      %v854 = vor.u32 %v849, %v853
      %v856 = vshll.u32 %v847, 16
      %v858 = vrot.slane %v856, 1
      %v859 = vsel %vm383, %v854, %v858
      %860 = vrot.lane.b32.xlu0 %v419, 28
      %v861 = vpop.permute.xlu0 %860
      %862 = vrot.lane.b32.xlu0 %v431, 28
      %v863 = vpop.permute.xlu0 %862
      %864 = vrot.lane.b32.xlu0 %v443, 28
      %v865 = vpop.permute.xlu0 %864
      %866 = vrot.lane.b32.xlu0 %v455, 28
      %v867 = vpop.permute.xlu0 %866
      %868 = vrot.lane.b32.xlu0 %v467, 28
      %v869 = vpop.permute.xlu0 %868
      %870 = vrot.lane.b32.xlu0 %v479, 28
      %v871 = vpop.permute.xlu0 %870
      %872 = vrot.lane.b32.xlu0 %v491, 28
      %v873 = vpop.permute.xlu0 %872
      %874 = vrot.lane.b32.xlu0 %v503, 28
      %v875 = vpop.permute.xlu0 %874
      %876 = vrot.lane.b32.xlu0 %v515, 28
      %v877 = vpop.permute.xlu0 %876
      %878 = vrot.lane.b32.xlu0 %v527, 28
      %v879 = vpop.permute.xlu0 %878
      %880 = vrot.lane.b32.xlu0 %v539, 28
      %v881 = vpop.permute.xlu0 %880
      %882 = vrot.lane.b32.xlu0 %v551, 28
      %v883 = vpop.permute.xlu0 %882
      %884 = vrot.lane.b32.xlu0 %v563, 28
      %v885 = vpop.permute.xlu0 %884
      %886 = vrot.lane.b32.xlu0 %v575, 28
      %v887 = vpop.permute.xlu0 %886
      %888 = vrot.lane.b32.xlu0 %v740, 28
      %v889 = vpop.permute.xlu0 %888
      %890 = vrot.lane.b32.xlu0 %v859, 28
      %v891 = vpop.permute.xlu0 %890
      %v892 = vrot.slane %v812, 1
      %v893 = vrot.slane %v847, 1
      %v894 = vsel %vm608, %v892, %v893
      %895 = vrot.lane.b32.xlu0 %v617, 32
      %v896 = vpop.permute.xlu0 %895
      %897 = vrot.lane.b32.xlu0 %v620, 32
      %v898 = vpop.permute.xlu0 %897
      %899 = vrot.lane.b32.xlu0 %v623, 32
      %v900 = vpop.permute.xlu0 %899
      %901 = vrot.lane.b32.xlu0 %v626, 32
      %v902 = vpop.permute.xlu0 %901
      %903 = vrot.lane.b32.xlu0 %v629, 32
      %v904 = vpop.permute.xlu0 %903
      %905 = vrot.lane.b32.xlu0 %v632, 32
      %v906 = vpop.permute.xlu0 %905
      %907 = vrot.lane.b32.xlu0 %v635, 32
      %v908 = vpop.permute.xlu0 %907
      %909 = vrot.lane.b32.xlu0 %v638, 32
      %v910 = vpop.permute.xlu0 %909
      %911 = vrot.lane.b32.xlu0 %v641, 32
      %v912 = vpop.permute.xlu0 %911
      %913 = vrot.lane.b32.xlu0 %v644, 32
      %v914 = vpop.permute.xlu0 %913
      %915 = vrot.lane.b32.xlu0 %v647, 32
      %v916 = vpop.permute.xlu0 %915
      %917 = vrot.lane.b32.xlu0 %v650, 32
      %v918 = vpop.permute.xlu0 %917
      %919 = vrot.lane.b32.xlu0 %v653, 32
      %v920 = vpop.permute.xlu0 %919
      %921 = vrot.lane.b32.xlu0 %v656, 32
      %v922 = vpop.permute.xlu0 %921
      %923 = vrot.lane.b32.xlu0 %v775, 32
      %v924 = vpop.permute.xlu0 %923
      %925 = vrot.lane.b32.xlu0 %v894, 32
      %v926 = vpop.permute.xlu0 %925
      %vm927 = vcmask 31744
      %v929 = vsel %vm927, %v319, %v577
      %v931 = vsel %vm927, %v320, %v579
      %v933 = vsel %vm927, %v321, %v581
      %v935 = vsel %vm927, %v322, %v583
      %v937 = vsel %vm927, %v323, %v585
      %v939 = vsel %vm927, %v324, %v587
      %v941 = vsel %vm927, %v325, %v589
      %v943 = vsel %vm927, %v326, %v591
      %v945 = vsel %vm927, %v327, %v593
      %v947 = vsel %vm927, %v328, %v595
      %v949 = vsel %vm927, %v329, %v597
      %v951 = vsel %vm927, %v330, %v599
      %v953 = vsel %vm927, %v331, %v601
      %v955 = vsel %vm927, %v332, %v603
      %v957 = vsel %vm927, %v333, %v605
      %v959 = vsel %vm927, %v334, %v607
      %vm960 = vcmask 64512
      %v962 = vsel %vm960, %v929, %v658
      %v964 = vsel %vm960, %v931, %v660
      %v966 = vsel %vm960, %v933, %v662
      %v968 = vsel %vm960, %v935, %v664
      %v970 = vsel %vm960, %v937, %v666
      %v972 = vsel %vm960, %v939, %v668
      %v974 = vsel %vm960, %v941, %v670
      %v976 = vsel %vm960, %v943, %v672
      %v978 = vsel %vm960, %v945, %v674
      %v980 = vsel %vm960, %v947, %v676
      %v982 = vsel %vm960, %v949, %v678
      %v984 = vsel %vm960, %v951, %v680
      %v986 = vsel %vm960, %v953, %v682
      %v988 = vsel %vm960, %v955, %v684
      %v990 = vsel %vm960, %v957, %v686
      %v992 = vsel %vm960, %v959, %v688
      %vm993 = vcmask 97280
      %v995 = vsel %vm993, %v962, %v695
      %v997 = vsel %vm993, %v964, %v697
      %v999 = vsel %vm993, %v966, %v699
      %v1001 = vsel %vm993, %v968, %v701
      %v1003 = vsel %vm993, %v970, %v703
      %v1005 = vsel %vm993, %v972, %v705
      %v1007 = vsel %vm993, %v974, %v707
      %v1009 = vsel %vm993, %v976, %v709
      %v1011 = vsel %vm993, %v978, %v711
      %v1013 = vsel %vm993, %v980, %v713
      %v1015 = vsel %vm993, %v982, %v715
      %v1017 = vsel %vm993, %v984, %v717
      %v1019 = vsel %vm993, %v986, %v719
      %v1021 = vsel %vm993, %v988, %v721
      %v1023 = vsel %vm993, %v990, %v723
      %v1025 = vsel %vm993, %v992, %v725
      %vm1026 = vcmask 130048
      %v1028 = vsel %vm1026, %v995, %v742
      %v1030 = vsel %vm1026, %v997, %v744
      %v1032 = vsel %vm1026, %v999, %v746
      %v1034 = vsel %vm1026, %v1001, %v748
      %v1036 = vsel %vm1026, %v1003, %v750
      %v1038 = vsel %vm1026, %v1005, %v752
      %v1040 = vsel %vm1026, %v1007, %v754
      %v1042 = vsel %vm1026, %v1009, %v756
      %v1044 = vsel %vm1026, %v1011, %v758
      %v1046 = vsel %vm1026, %v1013, %v760
      %v1048 = vsel %vm1026, %v1015, %v762
      %v1050 = vsel %vm1026, %v1017, %v764
      %v1052 = vsel %vm1026, %v1019, %v766
      %v1054 = vsel %vm1026, %v1021, %v768
      %v1056 = vsel %vm1026, %v1023, %v770
      %v1058 = vsel %vm1026, %v1025, %v772
      %vm1059 = vcmask 162816
      %v1061 = vsel %vm1059, %v1028, %v777
      %v1063 = vsel %vm1059, %v1030, %v779
      %v1065 = vsel %vm1059, %v1032, %v781
      %v1067 = vsel %vm1059, %v1034, %v783
      %v1069 = vsel %vm1059, %v1036, %v785
      %v1071 = vsel %vm1059, %v1038, %v787
      %v1073 = vsel %vm1059, %v1040, %v789
      %v1075 = vsel %vm1059, %v1042, %v791
      %v1077 = vsel %vm1059, %v1044, %v793
      %v1079 = vsel %vm1059, %v1046, %v795
      %v1081 = vsel %vm1059, %v1048, %v797
      %v1083 = vsel %vm1059, %v1050, %v799
      %v1085 = vsel %vm1059, %v1052, %v801
      %v1087 = vsel %vm1059, %v1054, %v803
      %v1089 = vsel %vm1059, %v1056, %v805
      %v1091 = vsel %vm1059, %v1058, %v807
      %vm1092 = vcmask 195584
      %v1094 = vsel %vm1092, %v1061, %v814
      %v1096 = vsel %vm1092, %v1063, %v816
      %v1098 = vsel %vm1092, %v1065, %v818
      %v1100 = vsel %vm1092, %v1067, %v820
      %v1102 = vsel %vm1092, %v1069, %v822
      %v1104 = vsel %vm1092, %v1071, %v824
      %v1106 = vsel %vm1092, %v1073, %v826
      %v1108 = vsel %vm1092, %v1075, %v828
      %v1110 = vsel %vm1092, %v1077, %v830
      %v1112 = vsel %vm1092, %v1079, %v832
      %v1114 = vsel %vm1092, %v1081, %v834
      %v1116 = vsel %vm1092, %v1083, %v836
      %v1118 = vsel %vm1092, %v1085, %v838
      %v1120 = vsel %vm1092, %v1087, %v840
      %v1122 = vsel %vm1092, %v1089, %v842
      %v1124 = vsel %vm1092, %v1091, %v844
      %vm1125 = vcmask 228352
      %v1127 = vsel %vm1125, %v1094, %v861
      %v1129 = vsel %vm1125, %v1096, %v863
      %v1131 = vsel %vm1125, %v1098, %v865
      %v1133 = vsel %vm1125, %v1100, %v867
      %v1135 = vsel %vm1125, %v1102, %v869
      %v1137 = vsel %vm1125, %v1104, %v871
      %v1139 = vsel %vm1125, %v1106, %v873
      %v1141 = vsel %vm1125, %v1108, %v875
      %v1143 = vsel %vm1125, %v1110, %v877
      %v1145 = vsel %vm1125, %v1112, %v879
      %v1147 = vsel %vm1125, %v1114, %v881
      %v1149 = vsel %vm1125, %v1116, %v883
      %v1151 = vsel %vm1125, %v1118, %v885
      %v1153 = vsel %vm1125, %v1120, %v887
      %v1155 = vsel %vm1125, %v1122, %v889
      %v1157 = vsel %vm1125, %v1124, %v891
      %vm1158 = vcmask 261120
      %v1160 = vsel %vm1158, %v1127, %v896
      %v1162 = vsel %vm1158, %v1129, %v898
      %v1164 = vsel %vm1158, %v1131, %v900
      %v1166 = vsel %vm1158, %v1133, %v902
      %v1168 = vsel %vm1158, %v1135, %v904
      %v1170 = vsel %vm1158, %v1137, %v906
      %v1172 = vsel %vm1158, %v1139, %v908
      %v1174 = vsel %vm1158, %v1141, %v910
      %v1176 = vsel %vm1158, %v1143, %v912
      %v1178 = vsel %vm1158, %v1145, %v914
      %v1180 = vsel %vm1158, %v1147, %v916
      %v1182 = vsel %vm1158, %v1149, %v918
      %v1184 = vsel %vm1158, %v1151, %v920
      %v1186 = vsel %vm1158, %v1153, %v922
      %v1188 = vsel %vm1158, %v1155, %v924
      %v1190 = vsel %vm1158, %v1157, %v926
      %v1191 = vld [vmem:[%s1] sm:$0xf]
      %v1192 = vld [vmem:[%s1 + $0x4] sm:$0xf]
      %v1193 = vld [vmem:[%s1 + $0x8] sm:$0xf]
      %v1194 = vld [vmem:[%s1 + $0xc] sm:$0xf]
      %v1195 = vld [vmem:[%s1 + $0x10] sm:$0x3]
      %v1196 = vld [vmem:[%s2] sm:$0x1]
      %v1198 = vlaneseq
      %v1199 = vshrl.u32 %v1198, 7
      %v1200 = vsub.s32 0, %v1199
      %v1201 = vrot.slane %v1196, %v1200
      %v1208 = vunpack.c.l.b16 %v1191
      %v1209 = vunpack.c.l.b16 %v1192
      %v1210 = vunpack.c.l.b16 %v1193
      %v1211 = vunpack.c.l.b16 %v1194
      %v1212 = vunpack.c.l.b16 %v1195
      %v1213 = vpack.c.b16 %v1209, %v1208
      %v1214 = vpack.c.b16 %v1211, %v1210
      %v1215 = vpack.c.b16 %v1212, %v1212
      %vm1218 = vcmask 293888
      %v1219 = vsel %vm1218, %v1160, 0
      %v1221 = vsel %vm1218, %v1162, 0
      %v1223 = vsel %vm1218, %v1164, 0
      %v1225 = vsel %vm1218, %v1166, 0
      %v1227 = vsel %vm1218, %v1168, 0
      %v1229 = vsel %vm1218, %v1170, 0
      %v1231 = vsel %vm1218, %v1172, 0
      %v1233 = vsel %vm1218, %v1174, 0
      %v1235 = vsel %vm1218, %v1176, 0
      %v1237 = vsel %vm1218, %v1178, 0
      %v1239 = vsel %vm1218, %v1180, 0
      %v1241 = vsel %vm1218, %v1182, 0
      %v1243 = vsel %vm1218, %v1184, 0
      %v1245 = vsel %vm1218, %v1186, 0
      %v1247 = vsel %vm1218, %v1188, 0
      %v1249 = vsel %vm1218, %v1190, 0
      %vm1251 = vcmask 1041408
      %v1253 = vsel %vm1251, %v1215, 0
      %1255 = vmatprep.subr.bf16.mxu0 0
      %1256 = vmatpush1.bf16.msra.mxu0 %v1213
      %1257 = vmatprep.subr.bf16.mxu0 0
      %1258 = vmatpush1.bf16.msra.mxu0 %v1214
      %1259 = vmatprep.subr.bf16.mxu0 0
      %1260 = vmatpush1.bf16.msra.mxu0 %v1253
      %1261 = vmatprep.subr.bf16.mxu0 0
      %1262 = vmatpush1.bf16.msra.mxu0 0
      %1263 = vmatprep.subr.bf16.mxu0 0
      %1264 = vmatpush1.bf16.msra.mxu0 0
      %1265 = vmatprep.subr.bf16.mxu0 0
      %1266 = vmatpush1.bf16.msra.mxu0 0
      %1267 = vmatprep.subr.bf16.mxu0 0
      %1268 = vmatpush1.bf16.msra.mxu0 0
      %1269 = vmatprep.subr.bf16.mxu0 0
      %1270 = vmatpush1.bf16.msra.mxu0 0
      %1271 = vmatprep.subr.bf16.mxu0 0
      %1272 = vmatpush1.bf16.msra.mxu0 0
      %1273 = vmatprep.subr.bf16.mxu0 0
      %1274 = vmatpush1.bf16.msra.mxu0 0
      %1275 = vmatprep.subr.bf16.mxu0 0
      %1276 = vmatpush1.bf16.msra.mxu0 0
      %1277 = vmatprep.subr.bf16.mxu0 0
      %1278 = vmatpush1.bf16.msra.mxu0 0
      %1279 = vmatprep.subr.bf16.mxu0 0
      %1280 = vmatpush1.bf16.msra.mxu0 0
      %1281 = vmatprep.subr.bf16.mxu0 0
      %1282 = vmatpush1.bf16.msra.mxu0 0
      %1283 = vmatprep.subr.bf16.mxu0 0
      %1284 = vmatpush1.bf16.msra.mxu0 0
      %1285 = vmatprep.subr.bf16.mxu0 0
      %1286 = vmatpush1.bf16.msra.mxu0 0
      %1287 = vmatprep.mubr.bf16.mxu0 0
      %1288 = vmatmul.mubr.bf16.gmra.mrb[0].mxu0 %v1219
      %v1289 = vpop.f32.mrb[0].mxu0
      %v1290 = vadd.f32 %v1201, %v1289
      %v1291 = vpop.f32.mrb[0].mxu0
      %v1292 = vpop.f32.mrb[0].mxu0
      %v1293 = vadd.f32 %v1201, %v1292
      %v1294 = vpop.f32.mrb[0].mxu0
      %1295 = vmatprep.mubr.bf16.mxu0 0
      %1296 = vmatmul.mubr.bf16.gmra.mrb[0].mxu0 %v1221
      %v1297 = vpop.f32.mrb[0].mxu0
      %v1298 = vadd.f32 %v1201, %v1297
      %v1299 = vpop.f32.mrb[0].mxu0
      %v1300 = vpop.f32.mrb[0].mxu0
      %v1301 = vadd.f32 %v1201, %v1300
      %v1302 = vpop.f32.mrb[0].mxu0
      %1303 = vmatprep.mubr.bf16.mxu0 0
      %1304 = vmatmul.mubr.bf16.gmra.mrb[0].mxu0 %v1223
      %v1305 = vpop.f32.mrb[0].mxu0
      %v1306 = vadd.f32 %v1201, %v1305
      %v1307 = vpop.f32.mrb[0].mxu0
      %v1308 = vpop.f32.mrb[0].mxu0
      %v1309 = vadd.f32 %v1201, %v1308
      %v1310 = vpop.f32.mrb[0].mxu0
      %1311 = vmatprep.mubr.bf16.mxu0 0
      %1312 = vmatmul.mubr.bf16.gmra.mrb[0].mxu0 %v1225
      %v1313 = vpop.f32.mrb[0].mxu0
      %v1314 = vadd.f32 %v1201, %v1313
      %v1315 = vpop.f32.mrb[0].mxu0
      %v1316 = vpop.f32.mrb[0].mxu0
      %v1317 = vadd.f32 %v1201, %v1316
      %v1318 = vpop.f32.mrb[0].mxu0
      %1319 = vmatprep.mubr.bf16.mxu0 0
      %1320 = vmatmul.mubr.bf16.gmra.mrb[0].mxu0 %v1227
      %v1321 = vpop.f32.mrb[0].mxu0
      %v1322 = vadd.f32 %v1201, %v1321
      %v1323 = vpop.f32.mrb[0].mxu0
      %v1324 = vpop.f32.mrb[0].mxu0
      %v1325 = vadd.f32 %v1201, %v1324
      %v1326 = vpop.f32.mrb[0].mxu0
      %1327 = vmatprep.mubr.bf16.mxu0 0
      %1328 = vmatmul.mubr.bf16.gmra.mrb[0].mxu0 %v1229
      %v1329 = vpop.f32.mrb[0].mxu0
      %v1330 = vadd.f32 %v1201, %v1329
      %v1331 = vpop.f32.mrb[0].mxu0
      %v1332 = vpop.f32.mrb[0].mxu0
      %v1333 = vadd.f32 %v1201, %v1332
      %v1334 = vpop.f32.mrb[0].mxu0
      %1335 = vmatprep.mubr.bf16.mxu0 0
      %1336 = vmatmul.mubr.bf16.gmra.mrb[0].mxu0 %v1231
      %v1337 = vpop.f32.mrb[0].mxu0
      %v1338 = vadd.f32 %v1201, %v1337
      %v1339 = vpop.f32.mrb[0].mxu0
      %v1340 = vpop.f32.mrb[0].mxu0
      %v1341 = vadd.f32 %v1201, %v1340
      %v1342 = vpop.f32.mrb[0].mxu0
      %1343 = vmatprep.mubr.bf16.mxu0 0
      %1344 = vmatmul.mubr.bf16.gmra.mrb[0].mxu0 %v1233
      %v1345 = vpop.f32.mrb[0].mxu0
      %v1346 = vadd.f32 %v1201, %v1345
      %v1347 = vpop.f32.mrb[0].mxu0
      %v1348 = vpop.f32.mrb[0].mxu0
      %v1349 = vadd.f32 %v1201, %v1348
      %v1350 = vpop.f32.mrb[0].mxu0
      %1351 = vmatprep.mubr.bf16.mxu0 0
      %1352 = vmatmul.mubr.bf16.gmra.mrb[0].mxu0 %v1235
      %v1353 = vpop.f32.mrb[0].mxu0
      %v1354 = vadd.f32 %v1201, %v1353
      %v1355 = vpop.f32.mrb[0].mxu0
      %v1356 = vpop.f32.mrb[0].mxu0
      %v1357 = vadd.f32 %v1201, %v1356
      %v1358 = vpop.f32.mrb[0].mxu0
      %1359 = vmatprep.mubr.bf16.mxu0 0
      %1360 = vmatmul.mubr.bf16.gmra.mrb[0].mxu0 %v1237
      %v1361 = vpop.f32.mrb[0].mxu0
      %v1362 = vadd.f32 %v1201, %v1361
      %v1363 = vpop.f32.mrb[0].mxu0
      %v1364 = vpop.f32.mrb[0].mxu0
      %v1365 = vadd.f32 %v1201, %v1364
      %v1366 = vpop.f32.mrb[0].mxu0
      %1367 = vmatprep.mubr.bf16.mxu0 0
      %1368 = vmatmul.mubr.bf16.gmra.mrb[0].mxu0 %v1239
      %v1369 = vpop.f32.mrb[0].mxu0
      %v1370 = vadd.f32 %v1201, %v1369
      %v1371 = vpop.f32.mrb[0].mxu0
      %v1372 = vpop.f32.mrb[0].mxu0
      %v1373 = vadd.f32 %v1201, %v1372
      %v1374 = vpop.f32.mrb[0].mxu0
      %1375 = vmatprep.mubr.bf16.mxu0 0
      %1376 = vmatmul.mubr.bf16.gmra.mrb[0].mxu0 %v1241
      %v1377 = vpop.f32.mrb[0].mxu0
      %v1378 = vadd.f32 %v1201, %v1377
      %v1379 = vpop.f32.mrb[0].mxu0
      %v1380 = vpop.f32.mrb[0].mxu0
      %v1381 = vadd.f32 %v1201, %v1380
      %v1382 = vpop.f32.mrb[0].mxu0
      %1383 = vmatprep.mubr.bf16.mxu0 0
      %1384 = vmatmul.mubr.bf16.gmra.mrb[0].mxu0 %v1243
      %v1385 = vpop.f32.mrb[0].mxu0
      %v1386 = vadd.f32 %v1201, %v1385
      %v1387 = vpop.f32.mrb[0].mxu0
      %v1388 = vpop.f32.mrb[0].mxu0
      %v1389 = vadd.f32 %v1201, %v1388
      %v1390 = vpop.f32.mrb[0].mxu0
      %1391 = vmatprep.mubr.bf16.mxu0 0
      %1392 = vmatmul.mubr.bf16.gmra.mrb[0].mxu0 %v1245
      %v1393 = vpop.f32.mrb[0].mxu0
      %v1394 = vadd.f32 %v1201, %v1393
      %v1395 = vpop.f32.mrb[0].mxu0
      %v1396 = vpop.f32.mrb[0].mxu0
      %v1397 = vadd.f32 %v1201, %v1396
      %v1398 = vpop.f32.mrb[0].mxu0
      %1399 = vmatprep.mubr.bf16.mxu0 0
      %1400 = vmatmul.mubr.bf16.gmra.mrb[0].mxu0 %v1247
      %v1401 = vpop.f32.mrb[0].mxu0
      %v1402 = vadd.f32 %v1201, %v1401
      %v1403 = vpop.f32.mrb[0].mxu0
      %v1404 = vpop.f32.mrb[0].mxu0
      %v1405 = vadd.f32 %v1201, %v1404
      %v1406 = vpop.f32.mrb[0].mxu0
      %1407 = vmatprep.mubr.bf16.mxu0 0
      %1408 = vmatmul.mubr.bf16.gmra.mrb[0].mxu0 %v1249
      %v1409 = vpop.f32.mrb[0].mxu0
      %v1410 = vadd.f32 %v1201, %v1409
      %v1411 = vpop.f32.mrb[0].mxu0
      %v1412 = vpop.f32.mrb[0].mxu0
      %v1413 = vadd.f32 %v1201, %v1412
      %v1414 = vpop.f32.mrb[0].mxu0
      %1415 = vdwg.mxu0
      %v1416 = vmax.f32 %v1290, 0.0
      %v1417 = vmax.f32 %v1293, 0.0
      %v1418 = vmax.f32 %v1298, 0.0
      %v1419 = vmax.f32 %v1301, 0.0
      %v1420 = vmax.f32 %v1306, 0.0
      %v1421 = vmax.f32 %v1309, 0.0
      %v1422 = vmax.f32 %v1314, 0.0
      %v1423 = vmax.f32 %v1317, 0.0
      %v1424 = vmax.f32 %v1322, 0.0
      %v1425 = vmax.f32 %v1325, 0.0
      %v1426 = vmax.f32 %v1330, 0.0
      %v1427 = vmax.f32 %v1333, 0.0
      %v1428 = vmax.f32 %v1338, 0.0
      %v1429 = vmax.f32 %v1341, 0.0
      %v1430 = vmax.f32 %v1346, 0.0
      %v1431 = vmax.f32 %v1349, 0.0
      %v1432 = vmax.f32 %v1354, 0.0
      %v1433 = vmax.f32 %v1357, 0.0
      %v1434 = vmax.f32 %v1362, 0.0
      %v1435 = vmax.f32 %v1365, 0.0
      %v1436 = vmax.f32 %v1370, 0.0
      %v1437 = vmax.f32 %v1373, 0.0
      %v1438 = vmax.f32 %v1378, 0.0
      %v1439 = vmax.f32 %v1381, 0.0
      %v1440 = vmax.f32 %v1386, 0.0
      %v1441 = vmax.f32 %v1389, 0.0
      %v1442 = vmax.f32 %v1394, 0.0
      %v1443 = vmax.f32 %v1397, 0.0
      %v1444 = vmax.f32 %v1402, 0.0
      %v1445 = vmax.f32 %v1405, 0.0
      %v1446 = vmax.f32 %v1410, 0.0
      %v1447 = vmax.f32 %v1413, 0.0
      %v1448 = vpack.c.bf16 %v1417, %v1416
      %v1449 = vpack.c.bf16 %v1419, %v1418
      %v1450 = vpack.c.bf16 %v1421, %v1420
      %v1451 = vpack.c.bf16 %v1423, %v1422
      %v1452 = vpack.c.bf16 %v1425, %v1424
      %v1453 = vpack.c.bf16 %v1427, %v1426
      %v1454 = vpack.c.bf16 %v1429, %v1428
      %v1455 = vpack.c.bf16 %v1431, %v1430
      %v1456 = vpack.c.bf16 %v1433, %v1432
      %v1457 = vpack.c.bf16 %v1435, %v1434
      %v1458 = vpack.c.bf16 %v1437, %v1436
      %v1459 = vpack.c.bf16 %v1439, %v1438
      %v1460 = vpack.c.bf16 %v1441, %v1440
      %v1461 = vpack.c.bf16 %v1443, %v1442
      %v1462 = vpack.c.bf16 %v1445, %v1444
      %v1463 = vpack.c.bf16 %v1447, %v1446
      %v1480 = vunpack.c.l.b16 %v1448
      %v1481 = vunpack.c.h.b16 %v1448
      %v1482 = vunpack.c.l.b16 %v1449
      %v1483 = vunpack.c.h.b16 %v1449
      %v1484 = vunpack.c.l.b16 %v1450
      %v1485 = vunpack.c.h.b16 %v1450
      %v1486 = vunpack.c.l.b16 %v1451
      %v1487 = vunpack.c.h.b16 %v1451
      %v1488 = vunpack.c.l.b16 %v1452
      %v1489 = vunpack.c.h.b16 %v1452
      %v1490 = vunpack.c.l.b16 %v1453
      %v1491 = vunpack.c.h.b16 %v1453
      %v1492 = vunpack.c.l.b16 %v1454
      %v1493 = vunpack.c.h.b16 %v1454
      %v1494 = vunpack.c.l.b16 %v1455
      %v1495 = vunpack.c.h.b16 %v1455
      %v1496 = vunpack.c.l.b16 %v1456
      %v1497 = vunpack.c.h.b16 %v1456
      %v1498 = vunpack.c.l.b16 %v1457
      %v1499 = vunpack.c.h.b16 %v1457
      %v1500 = vunpack.c.l.b16 %v1458
      %v1501 = vunpack.c.h.b16 %v1458
      %v1502 = vunpack.c.l.b16 %v1459
      %v1503 = vunpack.c.h.b16 %v1459
      %v1504 = vunpack.c.l.b16 %v1460
      %v1505 = vunpack.c.h.b16 %v1460
      %v1506 = vunpack.c.l.b16 %v1461
      %v1507 = vunpack.c.h.b16 %v1461
      %v1508 = vunpack.c.l.b16 %v1462
      %v1509 = vunpack.c.h.b16 %v1462
      %v1510 = vunpack.c.l.b16 %v1463
      %v1511 = vunpack.c.h.b16 %v1463
      %v1512 = vpack.c.b16 %v1480, %v1480
      %v1513 = vpack.c.b16 %v1481, %v1481
      %v1514 = vpack.c.b16 %v1482, %v1482
      %v1515 = vpack.c.b16 %v1483, %v1483
      %v1516 = vpack.c.b16 %v1484, %v1484
      %v1517 = vpack.c.b16 %v1485, %v1485
      %v1518 = vpack.c.b16 %v1486, %v1486
      %v1519 = vpack.c.b16 %v1487, %v1487
      %v1520 = vpack.c.b16 %v1488, %v1488
      %v1521 = vpack.c.b16 %v1489, %v1489
      %v1522 = vpack.c.b16 %v1490, %v1490
      %v1523 = vpack.c.b16 %v1491, %v1491
      %v1524 = vpack.c.b16 %v1492, %v1492
      %v1525 = vpack.c.b16 %v1493, %v1493
      %v1526 = vpack.c.b16 %v1494, %v1494
      %v1527 = vpack.c.b16 %v1495, %v1495
      %v1528 = vpack.c.b16 %v1496, %v1496
      %v1529 = vpack.c.b16 %v1497, %v1497
      %v1530 = vpack.c.b16 %v1498, %v1498
      %v1531 = vpack.c.b16 %v1499, %v1499
      %v1532 = vpack.c.b16 %v1500, %v1500
      %v1533 = vpack.c.b16 %v1501, %v1501
      %v1534 = vpack.c.b16 %v1502, %v1502
      %v1535 = vpack.c.b16 %v1503, %v1503
      %v1536 = vpack.c.b16 %v1504, %v1504
      %v1537 = vpack.c.b16 %v1505, %v1505
      %v1538 = vpack.c.b16 %v1506, %v1506
      %v1539 = vpack.c.b16 %v1507, %v1507
      %v1540 = vpack.c.b16 %v1508, %v1508
      %v1541 = vpack.c.b16 %v1509, %v1509
      %v1542 = vpack.c.b16 %v1510, %v1510
      %v1543 = vpack.c.b16 %v1511, %v1511
      %1576 = vst [vmem:[%s194] sm:$0xf] %v1512
      %1577 = vst [vmem:[%s194 + $0x4] sm:$0xf] %v1513
      %1578 = vst [vmem:[%s194 + $0x8] sm:$0xf] %v1514
      %1579 = vst [vmem:[%s194 + $0xc] sm:$0xf] %v1515
      %1580 = vst [vmem:[%s194 + $0x10] sm:$0xf] %v1516
      %1581 = vst [vmem:[%s194 + $0x14] sm:$0xf] %v1517
      %1582 = vst [vmem:[%s194 + $0x18] sm:$0xf] %v1518
      %1583 = vst [vmem:[%s194 + $0x1c] sm:$0xf] %v1519
      %1584 = vst [vmem:[%s194 + $0x20] sm:$0xf] %v1520
      %1585 = vst [vmem:[%s194 + $0x24] sm:$0xf] %v1521
      %1586 = vst [vmem:[%s194 + $0x28] sm:$0xf] %v1522
      %1587 = vst [vmem:[%s194 + $0x2c] sm:$0xf] %v1523
      %1588 = vst [vmem:[%s194 + $0x30] sm:$0xf] %v1524
      %1589 = vst [vmem:[%s194 + $0x34] sm:$0xf] %v1525
      %1590 = vst [vmem:[%s194 + $0x38] sm:$0xf] %v1526
      %1591 = vst [vmem:[%s194 + $0x3c] sm:$0xf] %v1527
      %1592 = vst [vmem:[%s194 + $0x40] sm:$0xf] %v1528
      %1593 = vst [vmem:[%s194 + $0x44] sm:$0xf] %v1529
      %1594 = vst [vmem:[%s194 + $0x48] sm:$0xf] %v1530
      %1595 = vst [vmem:[%s194 + $0x4c] sm:$0xf] %v1531
      %1596 = vst [vmem:[%s194 + $0x50] sm:$0xf] %v1532
      %1597 = vst [vmem:[%s194 + $0x54] sm:$0xf] %v1533
      %1598 = vst [vmem:[%s194 + $0x58] sm:$0xf] %v1534
      %1599 = vst [vmem:[%s194 + $0x5c] sm:$0xf] %v1535
      %1600 = vst [vmem:[%s194 + $0x60] sm:$0xf] %v1536
      %1601 = vst [vmem:[%s194 + $0x64] sm:$0xf] %v1537
      %1602 = vst [vmem:[%s194 + $0x68] sm:$0xf] %v1538
      %1603 = vst [vmem:[%s194 + $0x6c] sm:$0xf] %v1539
      %1604 = vst [vmem:[%s194 + $0x70] sm:$0xf] %v1540
      %1605 = vst [vmem:[%s194 + $0x74] sm:$0xf] %v1541
      %1606 = vst [vmem:[%s194 + $0x78] sm:$0xf] %v1542
      %1607 = vst [vmem:[%s194 + $0x7c] sm:$0xf] %v1543
      %s1608 = smul.u32 16, %s19
      %p1609 = scmp.lt.s32.totalorder %s18, 1
      %s1610 = scalar_select %p1609, %s18, 1
      %p1611 = scmp.lt.s32.totalorder %s1608, 15
      %s1612 = scalar_select %p1611, %s1608, 15
      %s1613 = smul.addr %s1612, 2
      %s1614 = smul.addr %s1610, 32
      %s1615 = sadd.s32 %s1613, %s1614
      %s1616 = smul.addr %s1615, 4
      %s1617 = scalar_lea.vmem %s3, %s1616
      // Predicated region
      $region33: #{conv_layer_forward.1} parent=31 // pred_check
        %p1618 = pneg %p114
      $region34: #{conv_layer_forward.1} parent=31 // pred_check_branch
        %1620 = sbr.rel (%p1618) target = $region36
      $region35: #{conv_layer_forward.1} parent=31 // pred_region
        %s1621 = smul.u32 16, %s19
      $region36: #{conv_layer_forward.1} parent=31 // pred_fallthru
        _
    $region32: #{conv_layer_forward.1} parent=5 // pred_fallthru
      _
    %p1622 = scmp.le.s32.totalorder 2, %s9
    // Predicated region
    $region37: #{conv_layer_forward.1} parent=5 // pred_check
      %p1623 = pneg %p1622
    $region38: #{conv_layer_forward.1} parent=5 // pred_check_branch
      %1625 = sbr.rel (%p1623) target = $region40
    $region39: #{conv_layer_forward.1} parent=5 // pred_region
      %s1626 = ssub.s32 %s9, 2
      // Predicated region
      $region41: #{conv_layer_forward.1} parent=39 // pred_check
        %p1627 = pneg %p120
      $region42: #{conv_layer_forward.1} parent=39 // pred_check_branch
        %1629 = sbr.rel (%p1627) target = $region44
      $region43: #{conv_layer_forward.1} parent=39 // pred_region
        %s1630 = smul.u32 16, %s21
        %p1631 = scmp.lt.s32.totalorder %s20, 1
        %s1632 = scalar_select %p1631, %s20, 1
        %p1633 = scmp.lt.s32.totalorder %s1630, 15
        %s1634 = scalar_select %p1633, %s1630, 15
        %s1635 = smul.addr %s1634, 2
        %s1636 = smul.addr %s1632, 32
        %s1637 = sadd.s32 %s1635, %s1636
        %s1638 = smul.addr %s1637, 4
        %s1639 = scalar_lea.vmem %s3, %s1638
      $region44: #{conv_layer_forward.1} parent=39 // pred_fallthru
        _
    $region40: #{conv_layer_forward.1} parent=5 // pred_fallthru
      _
  $region6: #{conv_layer_forward.1} parent=0 // loop_footer
    %s13 = sadd.s32 1, %s9
  $region7: #{conv_layer_forward.1} parent=0 // loop_footer_branch
    %8 = sbr.rel target = $region3
  $region8: #{conv_layer_forward.1} parent=0 // loop_exit
    _

</llo_original>
